<compile_context>
chip_gen: v5e
topology: v5e:2x2
jax: 0.10.0
libtpu: 0.0.40
codegen_flags: <defaults>
</compile_context>

<pallas_src>
import functools

import jax
import jax.numpy as jnp
from jax.experimental import pallas as pl
from jax.experimental.pallas import tpu as pltpu


def _round_up(x, m):
    return ((x + m - 1) // m) * m


def _pw_kernel(x_ref, w_ref, b_ref, o_ref, *, num_group):
    # x_ref: (C, TM)    channel-major activation tile (TM spatial positions in lanes)
    # w_ref: (G, C, C)  all block weights, W_g[out, in] (resident in VMEM)
    # b_ref: (G, C, 1)  all block biases as 2-D per-group tiles
    h = x_ref[...].astype(jnp.float32)          # (C, TM) f32 working value
    compute_dtype = w_ref.dtype                 # bf16 weights -> bf16 MXU inputs

    def apply_block(g, h):
        w = w_ref[g]                            # (C, C)
        b = b_ref[g].astype(jnp.float32)        # (C, 1) -> broadcast across lanes
        acc = jnp.dot(w, h.astype(compute_dtype),
                      preferred_element_type=jnp.float32)
        return jnp.maximum(acc + b, 0.0)        # bias + ReLU in f32 (v5e-safe)

    if num_group <= 8:
        # Small static group count: unroll (LLO scheduler visibility).
        for g in range(num_group):
            h = apply_block(g, h)
    else:
        # Large G: rolled loop keeps one weight tile live at a time.
        h = jax.lax.fori_loop(0, num_group, apply_block, h)

    o_ref[...] = h.astype(o_ref.dtype)


def pw_module_forward(x_nchw, weights, biases, *, tm=2048):
    """Apply the sequential point-wise blocks.

    x_nchw:  (N, C, H, W)
    weights: (G, C, C)  per-block 1x1-conv weights, PyTorch layout (C_out, C_in),
                        applied as h <- W_g @ h
    biases:  (G, C)     per-block biases
    """
    N, C, H, W = x_nchw.shape
    G, C_out, C_in = weights.shape
    assert C_out == C and C_in == C

    HW = H * W
    # Lane tile: multiple of 128, no larger than the (padded) spatial extent.
    tm = _round_up(max(128, min(tm, _round_up(HW, 128))), 128)
    HW_pad = _round_up(HW, tm)

    x3 = x_nchw.reshape(N, C, HW)               # pure reshape, no transpose
    if HW_pad != HW:
        # Padded spatial columns compute garbage that is sliced off below.
        x3 = jnp.pad(x3, ((0, 0), (0, 0), (0, HW_pad - HW)))

    b3 = biases.reshape(G, C, 1)                # 2-D per-group bias tiles

    grid = (N, HW_pad // tm)

    itemsize = jnp.dtype(x3.dtype).itemsize
    cost = pl.CostEstimate(
        flops=2 * G * N * HW_pad * C * C,
        transcendentals=0,
        bytes_accessed=(2 * N * C * HW_pad * itemsize
                        + weights.size * jnp.dtype(weights.dtype).itemsize
                        + b3.size * jnp.dtype(b3.dtype).itemsize),
    )

    kernel = functools.partial(_pw_kernel, num_group=G)

    out3 = pl.pallas_call(
        kernel,
        out_shape=jax.ShapeDtypeStruct((N, C, HW_pad), x3.dtype),
        grid_spec=pltpu.PrefetchScalarGridSpec(
            num_scalar_prefetch=0,
            grid=grid,
            in_specs=[
                # activation tile: kernel sees (C, tm), spatial positions in lanes
                pl.BlockSpec((None, C, tm), lambda n, i: (n, 0, i)),
                # all weights resident (grid-invariant index_map)
                pl.BlockSpec((G, C, C), lambda n, i: (0, 0, 0)),
                # all biases resident, 2-D per group
                pl.BlockSpec((G, C, 1), lambda n, i: (0, 0, 0)),
            ],
            out_specs=pl.BlockSpec((None, C, tm), lambda n, i: (n, 0, i)),
        ),
        compiler_params=pltpu.CompilerParams(
            dimension_semantics=("parallel", "parallel"),
            vmem_limit_bytes=64 * 1024 * 1024,
        ),
        cost_estimate=cost,
    )(x3, weights, b3)

    if HW_pad != HW:
        out3 = out3[:, :, :HW]
    return out3.reshape(N, C, H, W)


def _reference(x_nchw, weights, biases):
    """Pure-JAX reference of the same sequential point-wise blocks."""
    N, C, H, W = x_nchw.shape
    h = x_nchw.reshape(N, C, H * W).astype(jnp.float32)
    for g in range(weights.shape[0]):
        h = jnp.einsum("oc,ncm->nom", weights[g].astype(jnp.float32), h)
        h = jnp.maximum(h + biases[g].astype(jnp.float32)[None, :, None], 0.0)
    return h.reshape(N, C, H, W)


if __name__ == "__main__":
    # PWModule(block, num_group=2, in_channels=8):
    #   out_channels attribute = 16 (unused in forward)
    #   num_group_channels = 8 // 2 = 4
    N, C, H, W = 2, 8, 16, 16
    num_group = 2

    key = jax.random.PRNGKey(0)
    kx, kw, kb = jax.random.split(key, 3)

    x = jax.random.normal(kx, (N, C, H, W), dtype=jnp.float32)
    # W_g uses the PyTorch 1x1-conv layout (C_out, C_in); applied as h <- W_g @ h.
    weights = 0.1 * jax.random.normal(kw, (num_group, C, C), dtype=jnp.float32)
    biases = 0.01 * jax.random.normal(kb, (num_group, C), dtype=jnp.float32)

    # f32 path: exact check against the pure-JAX reference.
    out = jax.block_until_ready(pw_module_forward(x, weights, biases))
    ref = _reference(x, weights, biases)
    assert out.shape == (N, C, H, W)
    assert jnp.allclose(out, ref, atol=1e-5, rtol=1e-5)

    # bf16 input/weight path (halves HBM traffic on v6e/v7x); loose check only.
    out_bf16 = jax.block_until_ready(
        pw_module_forward(x.astype(jnp.bfloat16),
                          weights.astype(jnp.bfloat16),
                          biases.astype(jnp.bfloat16)))
    assert out_bf16.shape == (N, C, H, W)
    assert jnp.allclose(out_bf16.astype(jnp.float32), ref, atol=1e-1, rtol=1e-1)

    print("KERNEL_OK")
</pallas_src>

<mosaic_0001>
module attributes {stable_mosaic.version = 11 : i64} {
  func.func @_pw_kernel(%arg0: i32, %arg1: i32, %arg2: memref<1x8x256xf32, #tpu.memory_space<vmem>>, %arg3: memref<2x8x8xf32, #tpu.memory_space<vmem>>, %arg4: memref<2x8x1xf32, #tpu.memory_space<vmem>>, %arg5: memref<1x8x256xf32, #tpu.memory_space<vmem>>) attributes {dimension_semantics = [#tpu.dimension_semantics<parallel>, #tpu.dimension_semantics<parallel>], iteration_bounds = array<i64: 2, 1>, scalar_prefetch = 0 : i64, scratch_operands = 0 : i64, tpu.core_type = #tpu.core_type<tc>, window_params = [{transform_indices = @transform_0, window_bounds = array<i64: 1, 8, 256>}, {pipeline_mode = #tpu.pipeline_mode<synchronous>, transform_indices = @transform_1, window_bounds = array<i64: 2, 8, 8>}, {pipeline_mode = #tpu.pipeline_mode<synchronous>, transform_indices = @transform_2, window_bounds = array<i64: 2, 8, 1>}, {transform_indices = @transform_3, window_bounds = array<i64: 1, 8, 256>}]} {
    %c0 = arith.constant 0 : index
    %c0_0 = arith.constant 0 : index
    %c0_1 = arith.constant 0 : index
    %0 = vector.load %arg2[%c0, %c0_0, %c0_1] : memref<1x8x256xf32, #tpu.memory_space<vmem>>, vector<1x8x256xf32>
    %1 = vector.shape_cast %0 : vector<1x8x256xf32> to vector<8x256xf32>
    %c0_2 = arith.constant 0 : index
    %c0_3 = arith.constant 0 : index
    %c0_4 = arith.constant 0 : index
    %2 = vector.load %arg3[%c0_2, %c0_3, %c0_4] : memref<2x8x8xf32, #tpu.memory_space<vmem>>, vector<1x8x8xf32>
    %3 = vector.shape_cast %2 : vector<1x8x8xf32> to vector<8x8xf32>
    %c0_5 = arith.constant 0 : index
    %c0_6 = arith.constant 0 : index
    %c0_7 = arith.constant 0 : index
    %4 = vector.load %arg4[%c0_5, %c0_6, %c0_7] : memref<2x8x1xf32, #tpu.memory_space<vmem>>, vector<1x8x1xf32>
    %5 = vector.shape_cast %4 : vector<1x8x1xf32> to vector<8x1xf32>
    %cst = arith.constant dense<0.000000e+00> : vector<8x256xf32>
    %6 = tpu.matmul %3, %1, %cst {dimension_numbers = #tpu.dot_dimension_numbers<[1], [0], [0], [1], [0, 0, 1, 1], [], []>} : vector<8x8xf32>, vector<8x256xf32>, vector<8x256xf32> -> vector<8x256xf32>
    %7 = vector.broadcast %5 : vector<8x1xf32> to vector<8x256xf32>
    %8 = arith.addf %6, %7 : vector<8x256xf32>
    %cst_8 = arith.constant 0.000000e+00 : f32
    %9 = vector.broadcast %cst_8 : f32 to vector<8x256xf32>
    %10 = arith.maximumf %8, %9 : vector<8x256xf32>
    %c1 = arith.constant 1 : index
    %c0_9 = arith.constant 0 : index
    %c0_10 = arith.constant 0 : index
    %11 = vector.load %arg3[%c1, %c0_9, %c0_10] : memref<2x8x8xf32, #tpu.memory_space<vmem>>, vector<1x8x8xf32>
    %12 = vector.shape_cast %11 : vector<1x8x8xf32> to vector<8x8xf32>
    %c1_11 = arith.constant 1 : index
    %c0_12 = arith.constant 0 : index
    %c0_13 = arith.constant 0 : index
    %13 = vector.load %arg4[%c1_11, %c0_12, %c0_13] : memref<2x8x1xf32, #tpu.memory_space<vmem>>, vector<1x8x1xf32>
    %14 = vector.shape_cast %13 : vector<1x8x1xf32> to vector<8x1xf32>
    %cst_14 = arith.constant dense<0.000000e+00> : vector<8x256xf32>
    %15 = tpu.matmul %12, %10, %cst_14 {dimension_numbers = #tpu.dot_dimension_numbers<[1], [0], [0], [1], [0, 0, 1, 1], [], []>} : vector<8x8xf32>, vector<8x256xf32>, vector<8x256xf32> -> vector<8x256xf32>
    %16 = vector.broadcast %14 : vector<8x1xf32> to vector<8x256xf32>
    %17 = arith.addf %15, %16 : vector<8x256xf32>
    %cst_15 = arith.constant 0.000000e+00 : f32
    %18 = vector.broadcast %cst_15 : f32 to vector<8x256xf32>
    %19 = arith.maximumf %17, %18 : vector<8x256xf32>
    %c0_16 = arith.constant 0 : index
    %c0_17 = arith.constant 0 : index
    %c0_18 = arith.constant 0 : index
    %20 = vector.load %arg5[%c0_16, %c0_17, %c0_18] : memref<1x8x256xf32, #tpu.memory_space<vmem>>, vector<1x8x256xf32>
    %21 = vector.shape_cast %20 : vector<1x8x256xf32> to vector<8x256xf32>
    %22 = vector.shape_cast %19 : vector<8x256xf32> to vector<1x8x256xf32>
    tpu.vector_store %arg5[%c0_16, %c0_17, %c0_18], %22 {strides = array<i32>} : memref<1x8x256xf32, #tpu.memory_space<vmem>>, vector<1x8x256xf32>,
    return
  }
  func.func @transform_0(%arg0: i32, %arg1: i32) -> (i32, i32, i32) {
    %c0_i32 = arith.constant 0 : i32
    %c0_i32_0 = arith.constant 0 : i32
    return %arg0, %c0_i32, %arg1 : i32, i32, i32
  }
  func.func @transform_1(%arg0: i32, %arg1: i32) -> (i32, i32, i32) {
    %c0_i32 = arith.constant 0 : i32
    %c0_i32_0 = arith.constant 0 : i32
    %c0_i32_1 = arith.constant 0 : i32
    %c0_i32_2 = arith.constant 0 : i32
    return %c0_i32, %c0_i32_0, %c0_i32_1 : i32, i32, i32
  }
  func.func @transform_2(%arg0: i32, %arg1: i32) -> (i32, i32, i32) {
    %c0_i32 = arith.constant 0 : i32
    %c0_i32_0 = arith.constant 0 : i32
    %c0_i32_1 = arith.constant 0 : i32
    %c0_i32_2 = arith.constant 0 : i32
    return %c0_i32, %c0_i32_0, %c0_i32_1 : i32, i32, i32
  }
  func.func @transform_3(%arg0: i32, %arg1: i32) -> (i32, i32, i32) {
    %c0_i32 = arith.constant 0 : i32
    %c0_i32_0 = arith.constant 0 : i32
    return %arg0, %c0_i32, %arg1 : i32, i32, i32
  }
}

</mosaic_0001>

<llo_original>
// kernel: tpu_custom_call.1
$region0: #{tpu_custom_call.1}
  #allocation0 [shape = 'u32[]', space=smem, size = 0x4, offset = 0x4, fixed_abs, tag = 'smem constant byte address 0x4 - core index']
  #allocation1 [shape = 'u32[72,128]{1,0:T(1,128)}', space=vmem, size = 0x9000, scoped, tag = 'internal scratch']
  %s0 = inlined_call_operand.hbm [shape: f32[2,8,256], index: 0, kind: input, shape index: {}]
  %s1 = inlined_call_operand.vmem [shape: f32[2,8,8], index: 1, kind: input, shape index: {}]
  %s2 = inlined_call_operand.vmem [shape: f32[2,8,1], index: 2, kind: input, shape index: {}]
  %s3 = inlined_call_operand.hbm [shape: f32[2,8,256], index: 3, kind: output, shape index: {}]
  %s4 = sld [smem:[#allocation0]]
  $region49: #{tpu_custom_call.1} parent=0
    _
  %s6 = ssub.s32 1, %s4
  %s7 = scalar_select 0, %s6, %s4
  $region1: #{tpu_custom_call.1} parent=0
    #allocation2 [shape = 'u8[16384]{0}', space=vmem, size = 0x4000, scoped, tag = 'input window, operand 0']
    #allocation3 [shape = 's32[2]{0}', space=sflag, size = 0x8, scoped, tag = 'scoped memory for tpu_custom_call.1']
    #allocation4 [shape = 's32[2]{0}', space=sflag, size = 0x8, scoped, tag = 'scoped memory for tpu_custom_call.1']
    #allocation5 [shape = 'u8[16384]{0}', space=vmem, size = 0x4000, scoped, tag = 'output window, operand 0']
    %8 = vsyncpa [#allocation3], 0
    %s9 = scalar_lea.sflag [#allocation3], 1
    %10 = vsyncpa %s9, 0
    %11 = vsyncpa [#allocation4], 0
    %s12 = scalar_lea.sflag [#allocation4], 1
    %13 = vsyncpa %s12, 0
    loop: start=0, step=1, limit=4
    $region2: #{tpu_custom_call.1} parent=1 // loop_pre_header
      _
    $region3: #{tpu_custom_call.1} parent=1 // loop_header
      %s15 = sphi 0, %s19
      %p16 = scmp.ge.s32.totalorder %s15, 4
      %s22 = sphi 0, %s34
      %s23 = sphi 0, %s30
      %s24 = sphi 0, %s22
      %s25 = sphi 0, %s23
      %s26 = sphi 0, %s24
      %s27 = sphi 0, %s25
      %s39 = sphi 0, %s41
      %s42 = sphi 0, %s39
      %s43 = sphi 0, %s42
      %s59 = sphi 0, %s43
      %s63 = sphi 0, %s63
      %s65 = sphi 0, %s63
      %s66 = sphi 0, %s65
      %s80 = sphi 0, %s66
      %s84 = sphi 0, %s84
      %s86 = sphi 0, %s84
      %s87 = sphi 0, %s86
      %s101 = sphi 0, %s87
      %s109 = sphi 0, %s111
      %s112 = sphi 0, %s109
      %s113 = sphi 0, %s112
      %s129 = sphi 0, %s113
    $region4: #{tpu_custom_call.1} parent=1 // loop_header_branch
      %18 = sbr.rel (%p16) target = $region8
    $region5: #{tpu_custom_call.1} parent=1 // loop_body
      %s20 = ssub.s32 %s15, 1
      %s21 = ssub.s32 %s15, 2
      %s28 = sadd.s32 1, %s23
      %p29 = scmp.ge.s32.totalorder %s28, 1
      %s30 = scalar_select %p29, 0, %s28
      %s31 = sadd.s32 1, %s22
      %s32 = scalar_select %p29, %s31, %s22
      %p33 = scmp.ge.s32.totalorder %s32, 2
      %s34 = scalar_select %p33, 0, %s32
      %s35 = ssub.s32 %s22, %s34
      %s36 = ssub.s32 %s23, %s30
      %s37 = sor.u32 %s35, %s36
      %p38 = scmp.eq.s32.totalorder %s37, 0
      %s40 = sadd.s32 %s39, 1
      %s41 = scalar_select %p38, %s39, %s40
      %p44 = pneg %p38
      %p45 = scmp.eq.s32.totalorder %s15, 1
      %p46 = por %p44, %p45
      %p47 = scmp.ne.s32.totalorder %s39, %s42
      %p48 = scmp.eq.s32.totalorder %s15, 0
      %p49 = por %p47, %p48
      %p50 = scmp.ne.s32.totalorder %s39, %s42
      %p51 = scmp.eq.s32.totalorder %s20, 1
      %p52 = por %p50, %p51
      %p53 = scmp.ne.s32.totalorder %s42, %s43
      %p54 = scmp.eq.s32.totalorder %s20, 0
      %p55 = por %p53, %p54
      %p56 = scmp.ne.s32.totalorder %s42, %s43
      %p57 = scmp.eq.s32.totalorder %s21, 1
      %p58 = por %p56, %p57
      %p60 = scmp.ne.s32.totalorder %s43, %s59
      %p61 = scmp.eq.s32.totalorder %s21, 0
      %p62 = por %p60, %p61
      %s64 = sadd.s32 %s63, 1
      %p67 = scmp.eq.s32.totalorder %s15, 1
      %p68 = scmp.ne.s32.totalorder %s63, %s65
      %p69 = scmp.eq.s32.totalorder %s15, 0
      %p70 = por %p68, %p69
      %p71 = scmp.ne.s32.totalorder %s63, %s65
      %p72 = scmp.eq.s32.totalorder %s20, 1
      %p73 = por %p71, %p72
      %p74 = scmp.ne.s32.totalorder %s65, %s66
      %p75 = scmp.eq.s32.totalorder %s20, 0
      %p76 = por %p74, %p75
      %p77 = scmp.ne.s32.totalorder %s65, %s66
      %p78 = scmp.eq.s32.totalorder %s21, 1
      %p79 = por %p77, %p78
      %p81 = scmp.ne.s32.totalorder %s66, %s80
      %p82 = scmp.eq.s32.totalorder %s21, 0
      %p83 = por %p81, %p82
      %s85 = sadd.s32 %s84, 1
      %p88 = scmp.eq.s32.totalorder %s15, 1
      %p89 = scmp.ne.s32.totalorder %s84, %s86
      %p90 = scmp.eq.s32.totalorder %s15, 0
      %p91 = por %p89, %p90
      %p92 = scmp.ne.s32.totalorder %s84, %s86
      %p93 = scmp.eq.s32.totalorder %s20, 1
      %p94 = por %p92, %p93
      %p95 = scmp.ne.s32.totalorder %s86, %s87
      %p96 = scmp.eq.s32.totalorder %s20, 0
      %p97 = por %p95, %p96
      %p98 = scmp.ne.s32.totalorder %s86, %s87
      %p99 = scmp.eq.s32.totalorder %s21, 1
      %p100 = por %p98, %p99
      %p102 = scmp.ne.s32.totalorder %s87, %s101
      %p103 = scmp.eq.s32.totalorder %s21, 0
      %p104 = por %p102, %p103
      %s105 = ssub.s32 %s22, %s34
      %s106 = ssub.s32 %s23, %s30
      %s107 = sor.u32 %s105, %s106
      %p108 = scmp.eq.s32.totalorder %s107, 0
      %s110 = sadd.s32 %s109, 1
      %s111 = scalar_select %p108, %s109, %s110
      %p114 = pneg %p108
      %p115 = scmp.eq.s32.totalorder %s15, 1
      %p116 = por %p114, %p115
      %p117 = scmp.ne.s32.totalorder %s109, %s112
      %p118 = scmp.eq.s32.totalorder %s15, 0
      %p119 = por %p117, %p118
      %p120 = scmp.ne.s32.totalorder %s109, %s112
      %p121 = scmp.eq.s32.totalorder %s20, 1
      %p122 = por %p120, %p121
      %p123 = scmp.ne.s32.totalorder %s112, %s113
      %p124 = scmp.eq.s32.totalorder %s20, 0
      %p125 = por %p123, %p124
      %p126 = scmp.ne.s32.totalorder %s112, %s113
      %p127 = scmp.eq.s32.totalorder %s21, 1
      %p128 = por %p126, %p127
      %p130 = scmp.ne.s32.totalorder %s113, %s129
      %p131 = scmp.eq.s32.totalorder %s21, 0
      %p132 = por %p130, %p131
      %p133 = scmp.le.s32.totalorder 1, %s15
      %p134 = scmp.lt.s32.totalorder %s15, 3
      %p135 = pnand %p133, %p134
      %p136 = pneg %p135
      // Predicated region
      $region9: #{tpu_custom_call.1} parent=5 // pred_check
        _
      $region10: #{tpu_custom_call.1} parent=5 // pred_check_branch
        %138 = sbr.rel (%p135) target = $region12
      $region11: #{tpu_custom_call.1} parent=5 // pred_region
        %s139 = ssub.s32 %s15, 1
        // Predicated region
        $region13: #{tpu_custom_call.1} parent=11 // pred_check
          %p140 = pneg %p76
        $region14: #{tpu_custom_call.1} parent=11 // pred_check_branch
          %142 = sbr.rel (%p140) target = $region16
        $region15: #{tpu_custom_call.1} parent=11 // pred_region
          _
        $region16: #{tpu_custom_call.1} parent=11 // pred_fallthru
          _
        // Predicated region
        $region17: #{tpu_custom_call.1} parent=11 // pred_check
          %p143 = pneg %p97
        $region18: #{tpu_custom_call.1} parent=11 // pred_check_branch
          %145 = sbr.rel (%p143) target = $region20
        $region19: #{tpu_custom_call.1} parent=11 // pred_region
          _
        $region20: #{tpu_custom_call.1} parent=11 // pred_fallthru
          _
      $region12: #{tpu_custom_call.1} parent=5 // pred_fallthru
        _
      %p146 = scmp.lt.s32.totalorder %s15, 2
      // Predicated region
      $region21: #{tpu_custom_call.1} parent=5 // pred_check
        %p147 = pneg %p146
      $region22: #{tpu_custom_call.1} parent=5 // pred_check_branch
        %149 = sbr.rel (%p147) target = $region24
      $region23: #{tpu_custom_call.1} parent=5 // pred_region
        // Predicated region
        $region25: #{tpu_custom_call.1} parent=23 // pred_check
          %p150 = pneg %p49
        $region26: #{tpu_custom_call.1} parent=23 // pred_check_branch
          %152 = sbr.rel (%p150) target = $region28
        $region27: #{tpu_custom_call.1} parent=23 // pred_region
          %s153 = sand.u32 %s39, 1
          %s154 = scalar_lea.sflag [#allocation3], %s153
          %s155 = sand.u32 %s39, 1
          %s156 = smul.addr %s155, 16
          %s157 = scalar_lea.vmem [#allocation2], %s156
          %s158 = smul.u32 2, %s23
          %160 = vsyncadd %s154, 0
          %s161 = smul.addr %s22, 2
          %s162 = sadd.s32 %s158, %s161
          %s163 = smul.addr %s162, 8
          %s164 = scalar_lea.hbm %s0, %s163
          %s166 = sshll.u32 %s164, 4
          %s167 = int_to_ptr.hbm [resolvable:$true] %s166
          %s168 = sshll.u32 %s157, 4
          %s169 = int_to_ptr.vmem [resolvable:$true] %s168
          %171 = dma.hbm_to_vmem [thread:$0]  %s167, 256, %s169, %s154
        $region28: #{tpu_custom_call.1} parent=23 // pred_fallthru
          _
      $region24: #{tpu_custom_call.1} parent=5 // pred_fallthru
        _
      %p172 = scmp.le.s32.totalorder 1, %s15
      %p173 = scmp.lt.s32.totalorder %s15, 3
      %p174 = pnand %p172, %p173
      %p175 = pneg %p174
      // Predicated region
      $region29: #{tpu_custom_call.1} parent=5 // pred_check
        _
      $region30: #{tpu_custom_call.1} parent=5 // pred_check_branch
        %177 = sbr.rel (%p174) target = $region32
      $region31: #{tpu_custom_call.1} parent=5 // pred_region
        %s178 = ssub.s32 %s15, 1
        %s179 = sand.u32 %s42, 1
        %s180 = scalar_lea.sflag [#allocation3], %s179
        %s181 = sand.u32 %s42, 1
        %s182 = smul.addr %s181, 16
        %s183 = scalar_lea.vmem [#allocation2], %s182
        // Predicated region
        $region33: #{tpu_custom_call.1} parent=31 // pred_check
          %p184 = pneg %p55
        $region34: #{tpu_custom_call.1} parent=31 // pred_check_branch
          %186 = sbr.rel (%p184) target = $region36
        $region35: #{tpu_custom_call.1} parent=31 // pred_region
          %188 = dma.done %s180, 256
        $region36: #{tpu_custom_call.1} parent=31 // pred_fallthru
          _
        %s189 = sand.u32 %s42, 1
        %s190 = scalar_lea.sflag [#allocation3], %s189
        %s191 = sand.u32 %s42, 1
        %s192 = smul.addr %s191, 16
        %s193 = scalar_lea.vmem [#allocation2], %s192
        %p194 = pneg %p55
        %p195 = pneg %p52
        %p196 = pneg %p76
        %p197 = pneg %p73
        %p198 = pneg %p97
        %p199 = pneg %p94
        %p200 = pneg %p125
        %p201 = pneg %p122
        %s202 = sand.u32 %s112, 1
        %s203 = scalar_lea.sflag [#allocation4], %s202
        %s204 = sand.u32 %s112, 1
        %s205 = smul.addr %s204, 16
        %s206 = scalar_lea.vmem [#allocation5], %s205
        %s207 = smul.u32 2, %s25
        %s208 = smul.u32 2, %s25
        %v209 = vld [vmem:[%s183] sm:$0xff]
        %v210 = vld [vmem:[%s183 + $0x8] sm:$0xff]
        %v211 = vld [vmem:[%s1] sm:$0xff]
        %v212 = vld [vmem:[%s2] sm:$0xff]
        %214 = vset.pattern.permute.xlu0 0
        %215 = vperm.xlu0 %214, %v212
        %v216 = vpop.permute.xlu0 %215
        %vm218 = vcmask 64512
        %v220 = vsel %vm218, %v211, 0
        %222 = vmatpush.msra.mxu0 0.0
        %223 = vmatpush.msra.mxu0 0.0
        %224 = vmatpush.msra.mxu0 0.0
        %225 = vmatpush.msra.mxu0 0.0
        %226 = vmatpush.msra.mxu0 0.0
        %227 = vmatpush.msra.mxu0 0.0
        %228 = vmatpush.msra.mxu0 0.0
        %229 = vmatpush.msra.mxu0 0.0
        %230 = vmatpush.msra.mxu0 0.0
        %231 = vmatpush.msra.mxu0 0.0
        %232 = vmatpush.msra.mxu0 0.0
        %233 = vmatpush.msra.mxu0 0.0
        %234 = vmatpush.msra.mxu0 0.0
        %235 = vmatpush.msra.mxu0 0.0
        %236 = vmatpush.msra.mxu0 0.0
        %237 = vmatpush.msra.mxu0 %v209
        %238 = vmatmul.f32.gmra.mxu0 %v220
        %v239 = vpop.f32.mrf.mxu0
        %v240 = vadd.f32 %v216, %v239
        %241 = vdwg.mxu0
        %242 = vmatpush.msra.mxu0 0.0
        %243 = vmatpush.msra.mxu0 0.0
        %244 = vmatpush.msra.mxu0 0.0
        %245 = vmatpush.msra.mxu0 0.0
        %246 = vmatpush.msra.mxu0 0.0
        %247 = vmatpush.msra.mxu0 0.0
        %248 = vmatpush.msra.mxu0 0.0
        %249 = vmatpush.msra.mxu0 0.0
        %250 = vmatpush.msra.mxu0 0.0
        %251 = vmatpush.msra.mxu0 0.0
        %252 = vmatpush.msra.mxu0 0.0
        %253 = vmatpush.msra.mxu0 0.0
        %254 = vmatpush.msra.mxu0 0.0
        %255 = vmatpush.msra.mxu0 0.0
        %256 = vmatpush.msra.mxu0 0.0
        %257 = vmatpush.msra.mxu0 %v210
        %258 = vmatmul.f32.gmra.mxu0 %v220
        %v259 = vpop.f32.mrf.mxu0
        %v260 = vadd.f32 %v216, %v259
        %261 = vdwg.mxu0
        %v262 = vmax.f32 %v240, 0.0
        %v263 = vmax.f32 %v260, 0.0
        %s264 = scalar_lea.vmem %s1, 8
        %v265 = vld [vmem:[%s264] sm:$0xff]
        %s266 = scalar_lea.vmem %s2, 8
        %v267 = vld [vmem:[%s266] sm:$0xff]
        %269 = vset.pattern.permute.xlu0 0
        %270 = vperm.xlu0 %269, %v267
        %v271 = vpop.permute.xlu0 %270
        %v274 = vsel %vm218, %v265, 0
        %276 = vmatpush.msra.mxu0 0.0
        %277 = vmatpush.msra.mxu0 0.0
        %278 = vmatpush.msra.mxu0 0.0
        %279 = vmatpush.msra.mxu0 0.0
        %280 = vmatpush.msra.mxu0 0.0
        %281 = vmatpush.msra.mxu0 0.0
        %282 = vmatpush.msra.mxu0 0.0
        %283 = vmatpush.msra.mxu0 0.0
        %284 = vmatpush.msra.mxu0 0.0
        %285 = vmatpush.msra.mxu0 0.0
        %286 = vmatpush.msra.mxu0 0.0
        %287 = vmatpush.msra.mxu0 0.0
        %288 = vmatpush.msra.mxu0 0.0
        %289 = vmatpush.msra.mxu0 0.0
        %290 = vmatpush.msra.mxu0 0.0
        %291 = vmatpush.msra.mxu0 %v262
        %292 = vmatmul.f32.gmra.mxu0 %v274
        %v293 = vpop.f32.mrf.mxu0
        %v294 = vadd.f32 %v271, %v293
        %295 = vdwg.mxu0
        %296 = vmatpush.msra.mxu0 0.0
        %297 = vmatpush.msra.mxu0 0.0
        %298 = vmatpush.msra.mxu0 0.0
        %299 = vmatpush.msra.mxu0 0.0
        %300 = vmatpush.msra.mxu0 0.0
        %301 = vmatpush.msra.mxu0 0.0
        %302 = vmatpush.msra.mxu0 0.0
        %303 = vmatpush.msra.mxu0 0.0
        %304 = vmatpush.msra.mxu0 0.0
        %305 = vmatpush.msra.mxu0 0.0
        %306 = vmatpush.msra.mxu0 0.0
        %307 = vmatpush.msra.mxu0 0.0
        %308 = vmatpush.msra.mxu0 0.0
        %309 = vmatpush.msra.mxu0 0.0
        %310 = vmatpush.msra.mxu0 0.0
        %311 = vmatpush.msra.mxu0 %v263
        %312 = vmatmul.f32.gmra.mxu0 %v274
        %v313 = vpop.f32.mrf.mxu0
        %v314 = vadd.f32 %v271, %v313
        %315 = vdwg.mxu0
        %v316 = vmax.f32 %v294, 0.0
        %v317 = vmax.f32 %v314, 0.0
        %318 = vst [vmem:[%s206] sm:$0xff] %v316
        %319 = vst [vmem:[%s206 + $0x8] sm:$0xff] %v317
        %s320 = sand.u32 %s112, 1
        %s321 = scalar_lea.sflag [#allocation4], %s320
        %s322 = sand.u32 %s112, 1
        %s323 = smul.addr %s322, 16
        %s324 = scalar_lea.vmem [#allocation5], %s323
        // Predicated region
        $region37: #{tpu_custom_call.1} parent=31 // pred_check
          %p325 = pneg %p122
        $region38: #{tpu_custom_call.1} parent=31 // pred_check_branch
          %327 = sbr.rel (%p325) target = $region40
        $region39: #{tpu_custom_call.1} parent=31 // pred_region
          %s328 = smul.u32 2, %s25
          %330 = vsyncadd %s321, 0
          %s331 = smul.addr %s24, 2
          %s332 = sadd.s32 %s328, %s331
          %s333 = smul.addr %s332, 8
          %s334 = scalar_lea.hbm %s3, %s333
          %s336 = sshll.u32 %s324, 4
          %s337 = int_to_ptr.vmem [resolvable:$true] %s336
          %s338 = sshll.u32 %s334, 4
          %s339 = int_to_ptr.hbm [resolvable:$true] %s338
          %341 = dma.vmem_to_hbm [thread:$0]  %s337, 256, %s339, %s321
        $region40: #{tpu_custom_call.1} parent=31 // pred_fallthru
          _
      $region32: #{tpu_custom_call.1} parent=5 // pred_fallthru
        _
      %p342 = scmp.le.s32.totalorder 2, %s15
      // Predicated region
      $region41: #{tpu_custom_call.1} parent=5 // pred_check
        %p343 = pneg %p342
      $region42: #{tpu_custom_call.1} parent=5 // pred_check_branch
        %345 = sbr.rel (%p343) target = $region44
      $region43: #{tpu_custom_call.1} parent=5 // pred_region
        %s346 = ssub.s32 %s15, 2
        // Predicated region
        $region45: #{tpu_custom_call.1} parent=43 // pred_check
          %p347 = pneg %p128
        $region46: #{tpu_custom_call.1} parent=43 // pred_check_branch
          %349 = sbr.rel (%p347) target = $region48
        $region47: #{tpu_custom_call.1} parent=43 // pred_region
          %s350 = sand.u32 %s113, 1
          %s351 = scalar_lea.sflag [#allocation4], %s350
          %s352 = sand.u32 %s113, 1
          %s353 = smul.addr %s352, 16
          %s354 = scalar_lea.vmem [#allocation5], %s353
          %356 = dma.done %s351, 256
        $region48: #{tpu_custom_call.1} parent=43 // pred_fallthru
          _
      $region44: #{tpu_custom_call.1} parent=5 // pred_fallthru
        _
    $region6: #{tpu_custom_call.1} parent=1 // loop_footer
      %s19 = sadd.s32 1, %s15
    $region7: #{tpu_custom_call.1} parent=1 // loop_footer_branch
      %14 = sbr.rel target = $region3
    $region8: #{tpu_custom_call.1} parent=1 // loop_exit
      _
    %357 = vsyncpa [#allocation3], 1
    %s358 = scalar_lea.sflag [#allocation3], 1
    %359 = vsyncpa %s358, 1
    %360 = vsyncpa [#allocation4], 1
    %s361 = scalar_lea.sflag [#allocation4], 1
    %362 = vsyncpa %s361, 1

</llo_original>
